<compile_context>
chip_gen: v6e
topology: v6e:2x2x1
jax: 0.10.0
libtpu: 0.0.40
codegen_flags: <defaults>
</compile_context>

<pallas_src>
import jax
import jax.numpy as jnp
from jax.experimental import pallas as pl
from jax.experimental.pallas import tpu as pltpu


# ----------------------------------------------------------------------------
# Pallas kernels
# ----------------------------------------------------------------------------

def _matmul_affine_relu_kernel(x_ref, w_ref, scale_ref, bias_ref, o_ref):
    # y = relu((x @ w) * scale + bias)  -- 1x1/3x3(im2col) conv + folded BN + ReLU
    y = jnp.dot(x_ref[...], w_ref[...], preferred_element_type=jnp.float32)
    y = y * scale_ref[...] + bias_ref[...]
    o_ref[...] = jnp.maximum(y, 0.0).astype(o_ref.dtype)


def _down_proj_kernel(x_ref, wd_ref, scale_ref, bias_ref, wp_ref, o_ref):
    # fused: relu((x @ w_down) * scale + bias) @ w_proj
    h = jnp.dot(x_ref[...], wd_ref[...], preferred_element_type=jnp.float32)
    h = jnp.maximum(h * scale_ref[...] + bias_ref[...], 0.0)
    o_ref[...] = jnp.dot(h.astype(wp_ref.dtype), wp_ref[...],
                         preferred_element_type=jnp.float32).astype(o_ref.dtype)


def _proto_kernel(maskT_ref, feat_ref, o_ref):
    # Batched Weighted_GAP: protos[k] = sum_hw(feat * mask_k) / (sum(mask_k)+5e-4)
    mT = maskT_ref[...]                                     # (Kp, HW)
    f = feat_ref[...]                                       # (HW, C)
    num = jnp.dot(mT, f, preferred_element_type=jnp.float32)          # (Kp, C)
    area = jnp.sum(mT, axis=1, keepdims=True) + 0.0005                # (Kp, 1)
    o_ref[...] = num / area


def _cosdist_kernel(f_ref, pT_ref, o_ref):
    # Batched calDist: cosine_similarity(fts, proto_k, dim=channel) * 20 for all k
    f = f_ref[...]                                          # (TP, C)
    pT = pT_ref[...]                                        # (C, Kp)
    num = jnp.dot(f, pT, preferred_element_type=jnp.float32)          # (TP, Kp)
    fn = jnp.maximum(jnp.sqrt(jnp.sum(f * f, axis=1, keepdims=True)), 1e-8)   # (TP,1)
    pn = jnp.maximum(jnp.sqrt(jnp.sum(pT * pT, axis=0, keepdims=True)), 1e-8)  # (1,Kp)
    o_ref[...] = num / (fn * pn) * 20.0


# ----------------------------------------------------------------------------
# Pallas wrappers (P-tiled grids, parallel semantics, bf16 MXU operands)
# ----------------------------------------------------------------------------

_TILE_P = 512           # 512-row tiles reach ~85% of HBM roofline at real sizes


def _round_up(x, m):
    return ((x + m - 1) // m) * m


def _pad_rows(x, mult):
    p = x.shape[0]
    pp = _round_up(p, mult)
    if pp != p:
        x = jnp.pad(x, ((0, pp - p), (0, 0)))
    return x, p, pp


def matmul_affine_relu(x2d, w, scale, bias, out_dtype=jnp.float32):
    P, Cin = x2d.shape
    Cout = w.shape[1]
    tile = min(_TILE_P, _round_up(P, 8))
    xpad, P, Pp = _pad_rows(x2d, tile)
    out = pl.pallas_call(
        _matmul_affine_relu_kernel,
        out_shape=jax.ShapeDtypeStruct((Pp, Cout), out_dtype),
        grid=(Pp // tile,),
        in_specs=[pl.BlockSpec((tile, Cin), lambda i: (i, 0)),
                  pl.BlockSpec((Cin, Cout), lambda i: (0, 0)),
                  pl.BlockSpec((1, Cout), lambda i: (0, 0)),
                  pl.BlockSpec((1, Cout), lambda i: (0, 0))],
        out_specs=pl.BlockSpec((tile, Cout), lambda i: (i, 0)),
        compiler_params=pltpu.CompilerParams(dimension_semantics=("parallel",)),
    )(xpad.astype(jnp.bfloat16), w.astype(jnp.bfloat16),
      scale.reshape(1, Cout).astype(jnp.float32),
      bias.reshape(1, Cout).astype(jnp.float32))
    return out[:P] if Pp != P else out


def down_proj(x2d, wd, scale, bias, wp):
    P, Cin = x2d.shape
    Cmid = wd.shape[1]
    Cout = wp.shape[1]
    tile = min(_TILE_P, _round_up(P, 8))
    xpad, P, Pp = _pad_rows(x2d, tile)
    out = pl.pallas_call(
        _down_proj_kernel,
        out_shape=jax.ShapeDtypeStruct((Pp, Cout), jnp.float32),
        grid=(Pp // tile,),
        in_specs=[pl.BlockSpec((tile, Cin), lambda i: (i, 0)),
                  pl.BlockSpec((Cin, Cmid), lambda i: (0, 0)),
                  pl.BlockSpec((1, Cmid), lambda i: (0, 0)),
                  pl.BlockSpec((1, Cmid), lambda i: (0, 0)),
                  pl.BlockSpec((Cmid, Cout), lambda i: (0, 0))],
        out_specs=pl.BlockSpec((tile, Cout), lambda i: (i, 0)),
        compiler_params=pltpu.CompilerParams(dimension_semantics=("parallel",)),
    )(xpad.astype(jnp.bfloat16), wd.astype(jnp.bfloat16),
      scale.reshape(1, Cmid).astype(jnp.float32),
      bias.reshape(1, Cmid).astype(jnp.float32),
      wp.astype(jnp.bfloat16))
    return out[:P] if Pp != P else out


def weighted_gap_all(feat2d, maskT):
    # feat2d: (HW, C) f32, maskT: (Kp, HW) f32  ->  (Kp, C) prototypes
    HW, C = feat2d.shape
    Kp = maskT.shape[0]
    return pl.pallas_call(
        _proto_kernel,
        out_shape=jax.ShapeDtypeStruct((Kp, C), jnp.float32),
        grid=(1,),
        in_specs=[pl.BlockSpec((Kp, HW), lambda i: (0, 0)),
                  pl.BlockSpec((HW, C), lambda i: (0, 0))],
        out_specs=pl.BlockSpec((Kp, C), lambda i: (0, 0)),
    )(maskT, feat2d)


def cos_dist_all(fts2d, protosT):
    # fts2d: (HW, C) f32, protosT: (C, Kp) f32 -> (HW, Kp) scaled cosine sims
    HW, C = fts2d.shape
    Kp = protosT.shape[1]
    tile = min(_TILE_P, _round_up(HW, 8))
    fpad, HW, HWp = _pad_rows(fts2d, tile)
    out = pl.pallas_call(
        _cosdist_kernel,
        out_shape=jax.ShapeDtypeStruct((HWp, Kp), jnp.float32),
        grid=(HWp // tile,),
        in_specs=[pl.BlockSpec((tile, C), lambda i: (i, 0)),
                  pl.BlockSpec((C, Kp), lambda i: (0, 0))],
        out_specs=pl.BlockSpec((tile, Kp), lambda i: (i, 0)),
        compiler_params=pltpu.CompilerParams(dimension_semantics=("parallel",)),
    )(fpad, protosT)
    return out[:HW] if HWp != HW else out


# ----------------------------------------------------------------------------
# Plain-JAX glue (layout plumbing / resampling as small matmuls)
# ----------------------------------------------------------------------------

def conv3x3_bn_relu(x_nhwc, p, out_dtype=jnp.bfloat16):
    # im2col (glue) + fused matmul/BN/ReLU in Pallas.
    N, H, W, C = x_nhwc.shape
    xp = jnp.pad(x_nhwc, ((0, 0), (1, 1), (1, 1), (0, 0)))
    patches = [xp[:, dy:dy + H, dx:dx + W, :] for dy in range(3) for dx in range(3)]
    col = jnp.concatenate(patches, axis=-1).reshape(N * H * W, 9 * C)
    y = matmul_affine_relu(col, p['w'], p['scale'], p['bias'], out_dtype=out_dtype)
    return y.reshape(N, H, W, -1)


def maxpool2(x_nhwc):
    N, H, W, C = x_nhwc.shape
    return x_nhwc.reshape(N, H // 2, 2, W // 2, 2, C).max(axis=(2, 4))


def pool_mat(size, bins):
    # adaptive-avg-pool as a (bins, size) averaging matrix
    m = [[0.0] * size for _ in range(bins)]
    for i in range(bins):
        s = (i * size) // bins
        e = -((-(i + 1) * size) // bins)
        for j in range(s, e):
            m[i][j] = 1.0 / (e - s)
    return jnp.array(m, jnp.float32)


def interp_mat(src, dst):
    # 1-D bilinear interpolation matrix (dst, src), align_corners=True
    if dst == 1:
        pos = jnp.zeros((1,), jnp.float32)
    else:
        pos = jnp.arange(dst, dtype=jnp.float32) * (float(src - 1) / float(dst - 1))
    lo = jnp.floor(pos).astype(jnp.int32)
    hi = jnp.minimum(lo + 1, src - 1)
    frac = pos - lo.astype(jnp.float32)
    return (jax.nn.one_hot(lo, src, dtype=jnp.float32) * (1.0 - frac)[:, None]
            + jax.nn.one_hot(hi, src, dtype=jnp.float32) * frac[:, None])


# ----------------------------------------------------------------------------
# Parameters (deterministic synthetic init; BN folded to scale/bias, eval mode)
# ----------------------------------------------------------------------------

PPM_BINS = [1, 2, 3, 6]
FEA_DIM = 16          # scaled-down stand-in for VGG's 768
REDUCE_DIM = 32       # scaled-down stand-in for 1024


def init_params(key):
    kit = iter(jax.random.split(key, 64))

    def conv_bn(cin, cout, k):
        w = jax.random.normal(next(kit), (k * k * cin, cout), jnp.float32)
        w = w * ((k * k * cin) ** -0.5)
        gamma = 1.0 + 0.1 * jax.random.normal(next(kit), (cout,), jnp.float32)
        beta = 0.1 * jax.random.normal(next(kit), (cout,), jnp.float32)
        rmean = jnp.zeros((cout,), jnp.float32)
        rvar = jnp.ones((cout,), jnp.float32)
        scale = gamma / jnp.sqrt(rvar + 1e-5)
        bias = beta - rmean * scale
        return {'w': w, 'scale': scale, 'bias': bias}

    params = {
        # synthetic backbone (see TODO(synk) at top)
        'l0': conv_bn(3, 8, 3),
        'l1': conv_bn(8, 8, 3),
        'l2': conv_bn(8, 16, 3),
        'l3': conv_bn(16, 16, 3),
        'l4': conv_bn(16, FEA_DIM, 3),
        # down: 1x1 conv(fea_dim*2 -> reduce_dim) + BN + ReLU
        'down': conv_bn(2 * FEA_DIM, REDUCE_DIM, 1),
        # projector: 1x1 conv, bias=False
        'proj_w': jax.random.normal(next(kit), (REDUCE_DIM, REDUCE_DIM), jnp.float32)
                  * (REDUCE_DIM ** -0.5),
    }
    # PPM: one 1x1 conv + BN + ReLU per bin -> weights concatenated along Cout
    ppm = [conv_bn(FEA_DIM, FEA_DIM // 4, 1) for _ in PPM_BINS]
    params['ppm_w'] = jnp.concatenate([p['w'] for p in ppm], axis=1)
    params['ppm_scale'] = jnp.concatenate([p['scale'] for p in ppm], axis=0)
    params['ppm_bias'] = jnp.concatenate([p['bias'] for p in ppm], axis=0)
    return params


# ----------------------------------------------------------------------------
# FEWDomain.forward (eval branch)
# ----------------------------------------------------------------------------

def few_domain_forward(params, x, s_x, s_y, train_label_list):
    # x: (1,3,H,W) NCHW, s_x: (1,1,3,H,W), s_y: (1,1,H,W)
    h, w = x.shape[2], x.shape[3]
    s_x = s_x[0]                                            # squeeze(0) -> (1,3,H,W)
    temp_x = jnp.concatenate([x, s_x], axis=0)              # (2,3,H,W)
    t = jnp.transpose(temp_x, (0, 2, 3, 1)).astype(jnp.bfloat16)   # NCHW -> NHWC

    # shared trunk
    t = conv3x3_bn_relu(t, params['l0'])
    t = maxpool2(t)
    t = conv3x3_bn_relu(t, params['l1'])
    t = conv3x3_bn_relu(t, params['l2'])
    t = conv3x3_bn_relu(t, params['l3'])
    feat = conv3x3_bn_relu(t, params['l4'])                 # (2, fh, fw, FEA_DIM)
    N, fh, fw, _ = feat.shape
    feat_f32 = feat.astype(jnp.float32)

    # ---- PPM: adaptive pools as pooling-matrix matmuls, all four branch
    #      1x1 convs batched into ONE Pallas call (rows stacked, Cout concat) ----
    red = FEA_DIM // 4
    pooled_rows, meta = [], []
    for b in PPM_BINS:
        Ah, Aw = pool_mat(fh, b), pool_mat(fw, b)
        pooled = jnp.einsum('ih,jw,nhwc->nijc', Ah, Aw, feat_f32)    # (N,b,b,FEA_DIM)
        pooled_rows.append(pooled.reshape(N * b * b, FEA_DIM))
        meta.append((b, N * b * b))
    stacked = jnp.concatenate(pooled_rows, axis=0)
    y_all = matmul_affine_relu(stacked, params['ppm_w'], params['ppm_scale'],
                               params['ppm_bias'], out_dtype=jnp.float32)

    outs = [feat_f32]
    off = 0
    for idx, (b, nrows) in enumerate(meta):
        y = y_all[off:off + nrows, idx * red:(idx + 1) * red].reshape(N, b, b, red)
        off += nrows
        My, Mx = interp_mat(b, fh), interp_mat(b, fw)
        outs.append(jnp.einsum('ih,jw,nhwc->nijc', My, Mx, y))       # bilinear up
    feat_cat = jnp.concatenate(outs, axis=-1)               # (2, fh, fw, 2*FEA_DIM)

    # ---- fused down (1x1 conv + BN + ReLU) + projector (1x1 conv) ----
    feat2d = down_proj(feat_cat.reshape(N * fh * fw, 2 * FEA_DIM),
                       params['down']['w'], params['down']['scale'],
                       params['down']['bias'], params['proj_w'])     # (N*fh*fw, C)
    C = feat2d.shape[1]
    feat_nhwc = feat2d.reshape(N, fh, fw, C)
    query_2d = feat_nhwc[0].reshape(fh * fw, C)
    supp_2d = feat_nhwc[1].reshape(fh * fw, C)

    # ---- all class masks at once: bilinear downsample as two small matmuls ----
    K = len(train_label_list)
    Kp = _round_up(K, 8)
    mask_stack = jnp.stack([(s_y[0, 0] == c).astype(jnp.float32)
                            for c in train_label_list], axis=-1)     # (H, W, K)
    My, Mx = interp_mat(h, fh), interp_mat(w, fw)
    mask_ds = jnp.einsum('ih,jw,hwk->ijk', My, Mx, mask_stack).reshape(fh * fw, K)
    maskT = jnp.pad(mask_ds.T, ((0, Kp - K), (0, 0)))                # (Kp, fh*fw)

    # ---- batched Weighted_GAP (one matmul) and batched calDist (one matmul) ----
    protos = weighted_gap_all(supp_2d, maskT)                        # (Kp, C)
    dist_q = cos_dist_all(query_2d, protos.T)                        # (fh*fw, Kp)
    out_q = dist_q[:, :K].reshape(1, fh, fw, K)
    # TODO(synk): out_s (support-side distances) only feeds the training
    # CrossEntropy loss; the eval branch returns out_q only, so it is dropped.

    # zoom_factor != 1 -> upsample to (h, w), bilinear align_corners=True
    Uy, Ux = interp_mat(fh, h), interp_mat(fw, w)
    out_q = jnp.einsum('ih,jw,nhwc->nijc', Uy, Ux, out_q)            # (1,h,w,K)
    return jnp.transpose(out_q, (0, 3, 1, 2))                        # NCHW


# ----------------------------------------------------------------------------
# main
# ----------------------------------------------------------------------------

if __name__ == "__main__":
    key = jax.random.PRNGKey(0)
    kp, kx, ks, ky = jax.random.split(key, 4)

    params = init_params(kp)
    x = jax.random.normal(kx, (1, 3, 16, 16), jnp.float32)
    s_x = jax.random.normal(ks, (1, 1, 3, 16, 16), jnp.float32)
    s_y = jax.random.randint(ky, (1, 1, 16, 16), 0, 2).astype(jnp.float32)
    train_label_list = [0.0, 1.0]

    out_q = few_domain_forward(params, x, s_x, s_y, train_label_list)
    out_q = jax.block_until_ready(out_q)

    assert out_q.shape == (1, len(train_label_list), 16, 16), out_q.shape
    assert out_q.dtype == jnp.float32
    assert bool(jnp.all(jnp.isfinite(out_q)))
    print("KERNEL_OK")
</pallas_src>

<mosaic_0001>
module attributes {stable_mosaic.version = 11 : i64} {
  func.func @_matmul_affine_relu_kernel(%arg0: i32, %arg1: memref<512x27xbf16, #tpu.memory_space<vmem>>, %arg2: memref<27x8xbf16, #tpu.memory_space<vmem>>, %arg3: memref<1x8xf32, #tpu.memory_space<vmem>>, %arg4: memref<1x8xf32, #tpu.memory_space<vmem>>, %arg5: memref<512x8xbf16, #tpu.memory_space<vmem>>) attributes {dimension_semantics = [#tpu.dimension_semantics<parallel>], iteration_bounds = array<i64: 1>, scalar_prefetch = 0 : i64, scratch_operands = 0 : i64, tpu.core_type = #tpu.core_type<tc>, window_params = [{transform_indices = @transform_0, window_bounds = array<i64: 512, 27>}, {pipeline_mode = #tpu.pipeline_mode<synchronous>, transform_indices = @transform_1, window_bounds = array<i64: 27, 8>}, {pipeline_mode = #tpu.pipeline_mode<synchronous>, transform_indices = @transform_2, window_bounds = array<i64: 1, 8>}, {pipeline_mode = #tpu.pipeline_mode<synchronous>, transform_indices = @transform_3, window_bounds = array<i64: 1, 8>}, {transform_indices = @transform_4, window_bounds = array<i64: 512, 8>}]} {
    %c0 = arith.constant 0 : index
    %c0_0 = arith.constant 0 : index
    %0 = vector.load %arg1[%c0, %c0_0] : memref<512x27xbf16, #tpu.memory_space<vmem>>, vector<512x27xbf16>
    %c0_1 = arith.constant 0 : index
    %c0_2 = arith.constant 0 : index
    %1 = vector.load %arg2[%c0_1, %c0_2] : memref<27x8xbf16, #tpu.memory_space<vmem>>, vector<27x8xbf16>
    %cst = arith.constant dense<0.000000e+00> : vector<512x8xf32>
    %2 = tpu.matmul %0, %1, %cst {dimension_numbers = #tpu.dot_dimension_numbers<[1], [0], [0], [1], [0, 0, 1, 1], [], []>} : vector<512x27xbf16>, vector<27x8xbf16>, vector<512x8xf32> -> vector<512x8xf32>
    %c0_3 = arith.constant 0 : index
    %c0_4 = arith.constant 0 : index
    %3 = vector.load %arg3[%c0_3, %c0_4] : memref<1x8xf32, #tpu.memory_space<vmem>>, vector<1x8xf32>
    %4 = vector.broadcast %3 : vector<1x8xf32> to vector<512x8xf32>
    %5 = arith.mulf %2, %4 : vector<512x8xf32>
    %c0_5 = arith.constant 0 : index
    %c0_6 = arith.constant 0 : index
    %6 = vector.load %arg4[%c0_5, %c0_6] : memref<1x8xf32, #tpu.memory_space<vmem>>, vector<1x8xf32>
    %7 = vector.broadcast %6 : vector<1x8xf32> to vector<512x8xf32>
    %8 = arith.addf %5, %7 : vector<512x8xf32>
    %cst_7 = arith.constant 0.000000e+00 : f32
    %9 = vector.broadcast %cst_7 : f32 to vector<512x8xf32>
    %10 = arith.maximumf %8, %9 : vector<512x8xf32>
    %11 = arith.truncf %10 : vector<512x8xf32> to vector<512x8xbf16>
    %c0_8 = arith.constant 0 : index
    %c0_9 = arith.constant 0 : index
    %12 = vector.load %arg5[%c0_8, %c0_9] : memref<512x8xbf16, #tpu.memory_space<vmem>>, vector<512x8xbf16>
    tpu.vector_store %arg5[%c0_8, %c0_9], %11 {strides = array<i32>} : memref<512x8xbf16, #tpu.memory_space<vmem>>, vector<512x8xbf16>,
    return
  }
  func.func @transform_0(%arg0: i32) -> (i32, i32) {
    %c0_i32 = arith.constant 0 : i32
    %c0_i32_0 = arith.constant 0 : i32
    return %arg0, %c0_i32 : i32, i32
  }
  func.func @transform_1(%arg0: i32) -> (i32, i32) {
    %c0_i32 = arith.constant 0 : i32
    %c0_i32_0 = arith.constant 0 : i32
    %c0_i32_1 = arith.constant 0 : i32
    return %c0_i32, %c0_i32_0 : i32, i32
  }
  func.func @transform_2(%arg0: i32) -> (i32, i32) {
    %c0_i32 = arith.constant 0 : i32
    %c0_i32_0 = arith.constant 0 : i32
    %c0_i32_1 = arith.constant 0 : i32
    return %c0_i32, %c0_i32_0 : i32, i32
  }
  func.func @transform_3(%arg0: i32) -> (i32, i32) {
    %c0_i32 = arith.constant 0 : i32
    %c0_i32_0 = arith.constant 0 : i32
    %c0_i32_1 = arith.constant 0 : i32
    return %c0_i32, %c0_i32_0 : i32, i32
  }
  func.func @transform_4(%arg0: i32) -> (i32, i32) {
    %c0_i32 = arith.constant 0 : i32
    %c0_i32_0 = arith.constant 0 : i32
    return %arg0, %c0_i32 : i32, i32
  }
}

</mosaic_0001>

<llo_original>
// kernel: tpu_custom_call.1
$region0: #{tpu_custom_call.1}
  #allocation0 [shape = 'u32[]', space=smem, size = 0x4, offset = 0x4, fixed_abs, tag = 'smem constant byte address 0x4 - core index']
  #allocation1 [shape = 'u32[144,128]{1,0:T(1,128)}', space=vmem, size = 0x12000, scoped, tag = 'internal scratch']
  %s0 = inlined_call_operand.vmem [shape: bf16[512,27], index: 0, kind: input, shape index: {}]
  %s1 = inlined_call_operand.vmem [shape: bf16[27,8], index: 1, kind: input, shape index: {}]
  %s2 = inlined_call_operand.vmem [shape: f32[1,8], index: 2, kind: input, shape index: {}]
  %s3 = inlined_call_operand.vmem [shape: f32[1,8], index: 3, kind: input, shape index: {}]
  %s4 = inlined_call_operand.vmem [shape: bf16[512,8], index: 4, kind: output, shape index: {}]
  %s5 = sld [smem:[#allocation0]]
  $region26: #{tpu_custom_call.1} parent=0
    _
  %s7 = ssub.s32 1, %s5
  %s8 = scalar_select 0, %s7, %s5
  // Predicated region
  $region2: #{tpu_custom_call.1} parent=0 // pred_check
    _
  $region3: #{tpu_custom_call.1} parent=0 // pred_check_branch
    %10 = sbr.rel (0) target = $region5
  $region4: #{tpu_custom_call.1} parent=0 // pred_region
    _
  $region5: #{tpu_custom_call.1} parent=0 // pred_fallthru
    _
  // Predicated region
  $region6: #{tpu_custom_call.1} parent=0 // pred_check
    _
  $region7: #{tpu_custom_call.1} parent=0 // pred_check_branch
    %12 = sbr.rel (0) target = $region9
  $region8: #{tpu_custom_call.1} parent=0 // pred_region
    _
  $region9: #{tpu_custom_call.1} parent=0 // pred_fallthru
    _
  // Predicated region
  $region10: #{tpu_custom_call.1} parent=0 // pred_check
    _
  $region11: #{tpu_custom_call.1} parent=0 // pred_check_branch
    %14 = sbr.rel (0) target = $region13
  $region12: #{tpu_custom_call.1} parent=0 // pred_region
    _
  $region13: #{tpu_custom_call.1} parent=0 // pred_fallthru
    _
  // Predicated region
  $region14: #{tpu_custom_call.1} parent=0 // pred_check
    _
  $region15: #{tpu_custom_call.1} parent=0 // pred_check_branch
    %16 = sbr.rel (0) target = $region17
  $region16: #{tpu_custom_call.1} parent=0 // pred_region
    _
  $region17: #{tpu_custom_call.1} parent=0 // pred_fallthru
    _
  %v18 = vld [vmem:[%s0] sm:$0xf]
  %v19 = vld [vmem:[%s0 + $0x4] sm:$0xf]
  %v20 = vld [vmem:[%s0 + $0x8] sm:$0xf]
  %v21 = vld [vmem:[%s0 + $0xc] sm:$0xf]
  %v22 = vld [vmem:[%s0 + $0x10] sm:$0xf]
  %v23 = vld [vmem:[%s0 + $0x14] sm:$0xf]
  %v24 = vld [vmem:[%s0 + $0x18] sm:$0xf]
  %v25 = vld [vmem:[%s0 + $0x1c] sm:$0xf]
  %v26 = vld [vmem:[%s0 + $0x20] sm:$0xf]
  %v27 = vld [vmem:[%s0 + $0x24] sm:$0xf]
  %v28 = vld [vmem:[%s0 + $0x28] sm:$0xf]
  %v29 = vld [vmem:[%s0 + $0x2c] sm:$0xf]
  %v30 = vld [vmem:[%s0 + $0x30] sm:$0xf]
  %v31 = vld [vmem:[%s0 + $0x34] sm:$0xf]
  %v32 = vld [vmem:[%s0 + $0x38] sm:$0xf]
  %v33 = vld [vmem:[%s0 + $0x3c] sm:$0xf]
  %v34 = vld [vmem:[%s0 + $0x40] sm:$0xf]
  %v35 = vld [vmem:[%s0 + $0x44] sm:$0xf]
  %v36 = vld [vmem:[%s0 + $0x48] sm:$0xf]
  %v37 = vld [vmem:[%s0 + $0x4c] sm:$0xf]
  %v38 = vld [vmem:[%s0 + $0x50] sm:$0xf]
  %v39 = vld [vmem:[%s0 + $0x54] sm:$0xf]
  %v40 = vld [vmem:[%s0 + $0x58] sm:$0xf]
  %v41 = vld [vmem:[%s0 + $0x5c] sm:$0xf]
  %v42 = vld [vmem:[%s0 + $0x60] sm:$0xf]
  %v43 = vld [vmem:[%s0 + $0x64] sm:$0xf]
  %v44 = vld [vmem:[%s0 + $0x68] sm:$0xf]
  %v45 = vld [vmem:[%s0 + $0x6c] sm:$0xf]
  %v46 = vld [vmem:[%s0 + $0x70] sm:$0xf]
  %v47 = vld [vmem:[%s0 + $0x74] sm:$0xf]
  %v48 = vld [vmem:[%s0 + $0x78] sm:$0xf]
  %v49 = vld [vmem:[%s0 + $0x7c] sm:$0xf]
  %v50 = vld [vmem:[%s0 + $0x80] sm:$0xf]
  %v51 = vld [vmem:[%s0 + $0x84] sm:$0xf]
  %v52 = vld [vmem:[%s0 + $0x88] sm:$0xf]
  %v53 = vld [vmem:[%s0 + $0x8c] sm:$0xf]
  %v54 = vld [vmem:[%s0 + $0x90] sm:$0xf]
  %v55 = vld [vmem:[%s0 + $0x94] sm:$0xf]
  %v56 = vld [vmem:[%s0 + $0x98] sm:$0xf]
  %v57 = vld [vmem:[%s0 + $0x9c] sm:$0xf]
  %v58 = vld [vmem:[%s0 + $0xa0] sm:$0xf]
  %v59 = vld [vmem:[%s0 + $0xa4] sm:$0xf]
  %v60 = vld [vmem:[%s0 + $0xa8] sm:$0xf]
  %v61 = vld [vmem:[%s0 + $0xac] sm:$0xf]
  %v62 = vld [vmem:[%s0 + $0xb0] sm:$0xf]
  %v63 = vld [vmem:[%s0 + $0xb4] sm:$0xf]
  %v64 = vld [vmem:[%s0 + $0xb8] sm:$0xf]
  %v65 = vld [vmem:[%s0 + $0xbc] sm:$0xf]
  %v66 = vld [vmem:[%s0 + $0xc0] sm:$0xf]
  %v67 = vld [vmem:[%s0 + $0xc4] sm:$0xf]
  %v68 = vld [vmem:[%s0 + $0xc8] sm:$0xf]
  %v69 = vld [vmem:[%s0 + $0xcc] sm:$0xf]
  %v70 = vld [vmem:[%s0 + $0xd0] sm:$0xf]
  %v71 = vld [vmem:[%s0 + $0xd4] sm:$0xf]
  %v72 = vld [vmem:[%s0 + $0xd8] sm:$0xf]
  %v73 = vld [vmem:[%s0 + $0xdc] sm:$0xf]
  %v74 = vld [vmem:[%s0 + $0xe0] sm:$0xf]
  %v75 = vld [vmem:[%s0 + $0xe4] sm:$0xf]
  %v76 = vld [vmem:[%s0 + $0xe8] sm:$0xf]
  %v77 = vld [vmem:[%s0 + $0xec] sm:$0xf]
  %v78 = vld [vmem:[%s0 + $0xf0] sm:$0xf]
  %v79 = vld [vmem:[%s0 + $0xf4] sm:$0xf]
  %v80 = vld [vmem:[%s0 + $0xf8] sm:$0xf]
  %v81 = vld [vmem:[%s0 + $0xfc] sm:$0xf]
  %v82 = vld [vmem:[%s1] sm:$0xf]
  %v83 = vld [vmem:[%s1 + $0x4] sm:$0xf]
  %v84 = vld [vmem:[%s1 + $0x8] sm:$0xf]
  %v85 = vld [vmem:[%s1 + $0xc] sm:$0x3]
  %v150 = vunpack.c.l.b16 %v18
  %v151 = vunpack.c.l.b16 %v19
  %v152 = vunpack.c.l.b16 %v20
  %v153 = vunpack.c.l.b16 %v21
  %v154 = vunpack.c.l.b16 %v22
  %v155 = vunpack.c.l.b16 %v23
  %v156 = vunpack.c.l.b16 %v24
  %v157 = vunpack.c.l.b16 %v25
  %v158 = vunpack.c.l.b16 %v26
  %v159 = vunpack.c.l.b16 %v27
  %v160 = vunpack.c.l.b16 %v28
  %v161 = vunpack.c.l.b16 %v29
  %v162 = vunpack.c.l.b16 %v30
  %v163 = vunpack.c.l.b16 %v31
  %v164 = vunpack.c.l.b16 %v32
  %v165 = vunpack.c.l.b16 %v33
  %v166 = vunpack.c.l.b16 %v34
  %v167 = vunpack.c.l.b16 %v35
  %v168 = vunpack.c.l.b16 %v36
  %v169 = vunpack.c.l.b16 %v37
  %v170 = vunpack.c.l.b16 %v38
  %v171 = vunpack.c.l.b16 %v39
  %v172 = vunpack.c.l.b16 %v40
  %v173 = vunpack.c.l.b16 %v41
  %v174 = vunpack.c.l.b16 %v42
  %v175 = vunpack.c.l.b16 %v43
  %v176 = vunpack.c.l.b16 %v44
  %v177 = vunpack.c.l.b16 %v45
  %v178 = vunpack.c.l.b16 %v46
  %v179 = vunpack.c.l.b16 %v47
  %v180 = vunpack.c.l.b16 %v48
  %v181 = vunpack.c.l.b16 %v49
  %v182 = vunpack.c.l.b16 %v50
  %v183 = vunpack.c.l.b16 %v51
  %v184 = vunpack.c.l.b16 %v52
  %v185 = vunpack.c.l.b16 %v53
  %v186 = vunpack.c.l.b16 %v54
  %v187 = vunpack.c.l.b16 %v55
  %v188 = vunpack.c.l.b16 %v56
  %v189 = vunpack.c.l.b16 %v57
  %v190 = vunpack.c.l.b16 %v58
  %v191 = vunpack.c.l.b16 %v59
  %v192 = vunpack.c.l.b16 %v60
  %v193 = vunpack.c.l.b16 %v61
  %v194 = vunpack.c.l.b16 %v62
  %v195 = vunpack.c.l.b16 %v63
  %v196 = vunpack.c.l.b16 %v64
  %v197 = vunpack.c.l.b16 %v65
  %v198 = vunpack.c.l.b16 %v66
  %v199 = vunpack.c.l.b16 %v67
  %v200 = vunpack.c.l.b16 %v68
  %v201 = vunpack.c.l.b16 %v69
  %v202 = vunpack.c.l.b16 %v70
  %v203 = vunpack.c.l.b16 %v71
  %v204 = vunpack.c.l.b16 %v72
  %v205 = vunpack.c.l.b16 %v73
  %v206 = vunpack.c.l.b16 %v74
  %v207 = vunpack.c.l.b16 %v75
  %v208 = vunpack.c.l.b16 %v76
  %v209 = vunpack.c.l.b16 %v77
  %v210 = vunpack.c.l.b16 %v78
  %v211 = vunpack.c.l.b16 %v79
  %v212 = vunpack.c.l.b16 %v80
  %v213 = vunpack.c.l.b16 %v81
  %v214 = vpack.c.b16 %v151, %v150
  %v215 = vpack.c.b16 %v153, %v152
  %v216 = vpack.c.b16 %v155, %v154
  %v217 = vpack.c.b16 %v157, %v156
  %v218 = vpack.c.b16 %v159, %v158
  %v219 = vpack.c.b16 %v161, %v160
  %v220 = vpack.c.b16 %v163, %v162
  %v221 = vpack.c.b16 %v165, %v164
  %v222 = vpack.c.b16 %v167, %v166
  %v223 = vpack.c.b16 %v169, %v168
  %v224 = vpack.c.b16 %v171, %v170
  %v225 = vpack.c.b16 %v173, %v172
  %v226 = vpack.c.b16 %v175, %v174
  %v227 = vpack.c.b16 %v177, %v176
  %v228 = vpack.c.b16 %v179, %v178
  %v229 = vpack.c.b16 %v181, %v180
  %v230 = vpack.c.b16 %v183, %v182
  %v231 = vpack.c.b16 %v185, %v184
  %v232 = vpack.c.b16 %v187, %v186
  %v233 = vpack.c.b16 %v189, %v188
  %v234 = vpack.c.b16 %v191, %v190
  %v235 = vpack.c.b16 %v193, %v192
  %v236 = vpack.c.b16 %v195, %v194
  %v237 = vpack.c.b16 %v197, %v196
  %v238 = vpack.c.b16 %v199, %v198
  %v239 = vpack.c.b16 %v201, %v200
  %v240 = vpack.c.b16 %v203, %v202
  %v241 = vpack.c.b16 %v205, %v204
  %v242 = vpack.c.b16 %v207, %v206
  %v243 = vpack.c.b16 %v209, %v208
  %v244 = vpack.c.b16 %v211, %v210
  %v245 = vpack.c.b16 %v213, %v212
  %v250 = vunpack.c.l.b16 %v82
  %v251 = vunpack.c.l.b16 %v83
  %v252 = vunpack.c.l.b16 %v84
  %v253 = vunpack.c.l.b16 %v85
  %v254 = vpack.c.b16 %v251, %v250
  %v255 = vpack.c.b16 %v253, %v252
  %vm257 = vcmask 220160
  %v259 = vsel %vm257, %v214, 0
  %v262 = vsel %vm257, %v215, 0
  %v265 = vsel %vm257, %v216, 0
  %v268 = vsel %vm257, %v217, 0
  %v271 = vsel %vm257, %v218, 0
  %v274 = vsel %vm257, %v219, 0
  %v277 = vsel %vm257, %v220, 0
  %v280 = vsel %vm257, %v221, 0
  %v283 = vsel %vm257, %v222, 0
  %v286 = vsel %vm257, %v223, 0
  %v289 = vsel %vm257, %v224, 0
  %v292 = vsel %vm257, %v225, 0
  %v295 = vsel %vm257, %v226, 0
  %v298 = vsel %vm257, %v227, 0
  %v301 = vsel %vm257, %v228, 0
  %v304 = vsel %vm257, %v229, 0
  %v307 = vsel %vm257, %v230, 0
  %v310 = vsel %vm257, %v231, 0
  %v313 = vsel %vm257, %v232, 0
  %v316 = vsel %vm257, %v233, 0
  %v319 = vsel %vm257, %v234, 0
  %v322 = vsel %vm257, %v235, 0
  %v325 = vsel %vm257, %v236, 0
  %v328 = vsel %vm257, %v237, 0
  %v331 = vsel %vm257, %v238, 0
  %v334 = vsel %vm257, %v239, 0
  %v337 = vsel %vm257, %v240, 0
  %v340 = vsel %vm257, %v241, 0
  %v343 = vsel %vm257, %v242, 0
  %v346 = vsel %vm257, %v243, 0
  %v349 = vsel %vm257, %v244, 0
  %v352 = vsel %vm257, %v245, 0
  %vm354 = vcmask 1044480
  %vm355 = vcmask 1045504
  %v356 = vsel %vm354, 4294967295, 65535
  %v357 = vsel %vm355, %v356, 0
  %v359 = vand.u32 %v255, %v357
  %361 = vmatprep.subr.bf16.mxu0 0
  %362 = vmatpush1.bf16.msra.mxu0 0
  %363 = vmatprep.subr.bf16.mxu0 0
  %364 = vmatpush1.bf16.msra.mxu0 0
  %365 = vmatprep.subr.bf16.mxu0 0
  %366 = vmatpush1.bf16.msra.mxu0 0
  %367 = vmatprep.subr.bf16.mxu0 0
  %368 = vmatpush1.bf16.msra.mxu0 0
  %369 = vmatprep.subr.bf16.mxu0 0
  %370 = vmatpush1.bf16.msra.mxu0 0
  %371 = vmatprep.subr.bf16.mxu0 0
  %372 = vmatpush1.bf16.msra.mxu0 0
  %373 = vmatprep.subr.bf16.mxu0 0
  %374 = vmatpush1.bf16.msra.mxu0 %v359
  %375 = vmatprep.subr.bf16.mxu0 0
  %376 = vmatpush1.bf16.msra.mxu0 %v254
  %377 = vmatprep.subr.bf16.mxu0 0
  %378 = vmatpush2.bf16.msra.mxu0 0
  %379 = vmatprep.subr.bf16.mxu0 0
  %380 = vmatpush2.bf16.msra.mxu0 0
  %381 = vmatprep.subr.bf16.mxu0 0
  %382 = vmatpush2.bf16.msra.mxu0 0
  %383 = vmatprep.subr.bf16.mxu0 0
  %384 = vmatpush2.bf16.msra.mxu0 0
  %385 = vmatprep.subr.bf16.mxu0 0
  %386 = vmatpush2.bf16.msra.mxu0 0
  %387 = vmatprep.subr.bf16.mxu0 0
  %388 = vmatpush2.bf16.msra.mxu0 0
  %389 = vmatprep.subr.bf16.mxu0 0
  %390 = vmatpush2.bf16.msra.mxu0 0
  %391 = vmatprep.subr.bf16.mxu0 0
  %392 = vmatpush2.bf16.msra.mxu0 0
  %393 = vmatprep.mubr.bf16.mxu0 0
  %394 = vmatmul.mubr.bf16.gmra.mxu0 %v259
  %v395 = vpop.f32.mrf.mxu0
  %v396 = vadd.f32 0.0, %v395
  %v397 = vpop.f32.mrf.mxu0
  %v398 = vpop.f32.mrf.mxu0
  %v399 = vadd.f32 0.0, %v398
  %v400 = vpop.f32.mrf.mxu0
  %401 = vmatprep.mubr.bf16.mxu0 0
  %402 = vmatmul.mubr.bf16.gmra.mxu0 %v262
  %v403 = vpop.f32.mrf.mxu0
  %v404 = vadd.f32 0.0, %v403
  %v405 = vpop.f32.mrf.mxu0
  %v406 = vpop.f32.mrf.mxu0
  %v407 = vadd.f32 0.0, %v406
  %v408 = vpop.f32.mrf.mxu0
  %409 = vmatprep.mubr.bf16.mxu0 0
  %410 = vmatmul.mubr.bf16.gmra.mxu0 %v265
  %v411 = vpop.f32.mrf.mxu0
  %v412 = vadd.f32 0.0, %v411
  %v413 = vpop.f32.mrf.mxu0
  %v414 = vpop.f32.mrf.mxu0
  %v415 = vadd.f32 0.0, %v414
  %v416 = vpop.f32.mrf.mxu0
  %417 = vmatprep.mubr.bf16.mxu0 0
  %418 = vmatmul.mubr.bf16.gmra.mxu0 %v268
  %v419 = vpop.f32.mrf.mxu0
  %v420 = vadd.f32 0.0, %v419
  %v421 = vpop.f32.mrf.mxu0
  %v422 = vpop.f32.mrf.mxu0
  %v423 = vadd.f32 0.0, %v422
  %v424 = vpop.f32.mrf.mxu0
  %425 = vmatprep.mubr.bf16.mxu0 0
  %426 = vmatmul.mubr.bf16.gmra.mxu0 %v271
  %v427 = vpop.f32.mrf.mxu0
  %v428 = vadd.f32 0.0, %v427
  %v429 = vpop.f32.mrf.mxu0
  %v430 = vpop.f32.mrf.mxu0
  %v431 = vadd.f32 0.0, %v430
  %v432 = vpop.f32.mrf.mxu0
  %433 = vmatprep.mubr.bf16.mxu0 0
  %434 = vmatmul.mubr.bf16.gmra.mxu0 %v274
  %v435 = vpop.f32.mrf.mxu0
  %v436 = vadd.f32 0.0, %v435
  %v437 = vpop.f32.mrf.mxu0
  %v438 = vpop.f32.mrf.mxu0
  %v439 = vadd.f32 0.0, %v438
  %v440 = vpop.f32.mrf.mxu0
  %441 = vmatprep.mubr.bf16.mxu0 0
  %442 = vmatmul.mubr.bf16.gmra.mxu0 %v277
  %v443 = vpop.f32.mrf.mxu0
  %v444 = vadd.f32 0.0, %v443
  %v445 = vpop.f32.mrf.mxu0
  %v446 = vpop.f32.mrf.mxu0
  %v447 = vadd.f32 0.0, %v446
  %v448 = vpop.f32.mrf.mxu0
  %449 = vmatprep.mubr.bf16.mxu0 0
  %450 = vmatmul.mubr.bf16.gmra.mxu0 %v280
  %v451 = vpop.f32.mrf.mxu0
  %v452 = vadd.f32 0.0, %v451
  %v453 = vpop.f32.mrf.mxu0
  %v454 = vpop.f32.mrf.mxu0
  %v455 = vadd.f32 0.0, %v454
  %v456 = vpop.f32.mrf.mxu0
  %457 = vmatprep.mubr.bf16.mxu0 0
  %458 = vmatmul.mubr.bf16.gmra.mxu0 %v283
  %v459 = vpop.f32.mrf.mxu0
  %v460 = vadd.f32 0.0, %v459
  %v461 = vpop.f32.mrf.mxu0
  %v462 = vpop.f32.mrf.mxu0
  %v463 = vadd.f32 0.0, %v462
  %v464 = vpop.f32.mrf.mxu0
  %465 = vmatprep.mubr.bf16.mxu0 0
  %466 = vmatmul.mubr.bf16.gmra.mxu0 %v286
  %v467 = vpop.f32.mrf.mxu0
  %v468 = vadd.f32 0.0, %v467
  %v469 = vpop.f32.mrf.mxu0
  %v470 = vpop.f32.mrf.mxu0
  %v471 = vadd.f32 0.0, %v470
  %v472 = vpop.f32.mrf.mxu0
  %473 = vmatprep.mubr.bf16.mxu0 0
  %474 = vmatmul.mubr.bf16.gmra.mxu0 %v289
  %v475 = vpop.f32.mrf.mxu0
  %v476 = vadd.f32 0.0, %v475
  %v477 = vpop.f32.mrf.mxu0
  %v478 = vpop.f32.mrf.mxu0
  %v479 = vadd.f32 0.0, %v478
  %v480 = vpop.f32.mrf.mxu0
  %481 = vmatprep.mubr.bf16.mxu0 0
  %482 = vmatmul.mubr.bf16.gmra.mxu0 %v292
  %v483 = vpop.f32.mrf.mxu0
  %v484 = vadd.f32 0.0, %v483
  %v485 = vpop.f32.mrf.mxu0
  %v486 = vpop.f32.mrf.mxu0
  %v487 = vadd.f32 0.0, %v486
  %v488 = vpop.f32.mrf.mxu0
  %489 = vmatprep.mubr.bf16.mxu0 0
  %490 = vmatmul.mubr.bf16.gmra.mxu0 %v295
  %v491 = vpop.f32.mrf.mxu0
  %v492 = vadd.f32 0.0, %v491
  %v493 = vpop.f32.mrf.mxu0
  %v494 = vpop.f32.mrf.mxu0
  %v495 = vadd.f32 0.0, %v494
  %v496 = vpop.f32.mrf.mxu0
  %497 = vmatprep.mubr.bf16.mxu0 0
  %498 = vmatmul.mubr.bf16.gmra.mxu0 %v298
  %v499 = vpop.f32.mrf.mxu0
  %v500 = vadd.f32 0.0, %v499
  %v501 = vpop.f32.mrf.mxu0
  %v502 = vpop.f32.mrf.mxu0
  %v503 = vadd.f32 0.0, %v502
  %v504 = vpop.f32.mrf.mxu0
  %505 = vmatprep.mubr.bf16.mxu0 0
  %506 = vmatmul.mubr.bf16.gmra.mxu0 %v301
  %v507 = vpop.f32.mrf.mxu0
  %v508 = vadd.f32 0.0, %v507
  %v509 = vpop.f32.mrf.mxu0
  %v510 = vpop.f32.mrf.mxu0
  %v511 = vadd.f32 0.0, %v510
  %v512 = vpop.f32.mrf.mxu0
  %513 = vmatprep.mubr.bf16.mxu0 0
  %514 = vmatmul.mubr.bf16.gmra.mxu0 %v304
  %v515 = vpop.f32.mrf.mxu0
  %v516 = vadd.f32 0.0, %v515
  %v517 = vpop.f32.mrf.mxu0
  %v518 = vpop.f32.mrf.mxu0
  %v519 = vadd.f32 0.0, %v518
  %v520 = vpop.f32.mrf.mxu0
  %521 = vmatprep.mubr.bf16.mxu0 0
  %522 = vmatmul.mubr.bf16.gmra.mxu0 %v307
  %v523 = vpop.f32.mrf.mxu0
  %v524 = vadd.f32 0.0, %v523
  %v525 = vpop.f32.mrf.mxu0
  %v526 = vpop.f32.mrf.mxu0
  %v527 = vadd.f32 0.0, %v526
  %v528 = vpop.f32.mrf.mxu0
  %529 = vmatprep.mubr.bf16.mxu0 0
  %530 = vmatmul.mubr.bf16.gmra.mxu0 %v310
  %v531 = vpop.f32.mrf.mxu0
  %v532 = vadd.f32 0.0, %v531
  %v533 = vpop.f32.mrf.mxu0
  %v534 = vpop.f32.mrf.mxu0
  %v535 = vadd.f32 0.0, %v534
  %v536 = vpop.f32.mrf.mxu0
  %537 = vmatprep.mubr.bf16.mxu0 0
  %538 = vmatmul.mubr.bf16.gmra.mxu0 %v313
  %v539 = vpop.f32.mrf.mxu0
  %v540 = vadd.f32 0.0, %v539
  %v541 = vpop.f32.mrf.mxu0
  %v542 = vpop.f32.mrf.mxu0
  %v543 = vadd.f32 0.0, %v542
  %v544 = vpop.f32.mrf.mxu0
  %545 = vmatprep.mubr.bf16.mxu0 0
  %546 = vmatmul.mubr.bf16.gmra.mxu0 %v316
  %v547 = vpop.f32.mrf.mxu0
  %v548 = vadd.f32 0.0, %v547
  %v549 = vpop.f32.mrf.mxu0
  %v550 = vpop.f32.mrf.mxu0
  %v551 = vadd.f32 0.0, %v550
  %v552 = vpop.f32.mrf.mxu0
  %553 = vmatprep.mubr.bf16.mxu0 0
  %554 = vmatmul.mubr.bf16.gmra.mxu0 %v319
  %v555 = vpop.f32.mrf.mxu0
  %v556 = vadd.f32 0.0, %v555
  %v557 = vpop.f32.mrf.mxu0
  %v558 = vpop.f32.mrf.mxu0
  %v559 = vadd.f32 0.0, %v558
  %v560 = vpop.f32.mrf.mxu0
  %561 = vmatprep.mubr.bf16.mxu0 0
  %562 = vmatmul.mubr.bf16.gmra.mxu0 %v322
  %v563 = vpop.f32.mrf.mxu0
  %v564 = vadd.f32 0.0, %v563
  %v565 = vpop.f32.mrf.mxu0
  %v566 = vpop.f32.mrf.mxu0
  %v567 = vadd.f32 0.0, %v566
  %v568 = vpop.f32.mrf.mxu0
  %569 = vmatprep.mubr.bf16.mxu0 0
  %570 = vmatmul.mubr.bf16.gmra.mxu0 %v325
  %v571 = vpop.f32.mrf.mxu0
  %v572 = vadd.f32 0.0, %v571
  %v573 = vpop.f32.mrf.mxu0
  %v574 = vpop.f32.mrf.mxu0
  %v575 = vadd.f32 0.0, %v574
  %v576 = vpop.f32.mrf.mxu0
  %577 = vmatprep.mubr.bf16.mxu0 0
  %578 = vmatmul.mubr.bf16.gmra.mxu0 %v328
  %v579 = vpop.f32.mrf.mxu0
  %v580 = vadd.f32 0.0, %v579
  %v581 = vpop.f32.mrf.mxu0
  %v582 = vpop.f32.mrf.mxu0
  %v583 = vadd.f32 0.0, %v582
  %v584 = vpop.f32.mrf.mxu0
  %585 = vmatprep.mubr.bf16.mxu0 0
  %586 = vmatmul.mubr.bf16.gmra.mxu0 %v331
  %v587 = vpop.f32.mrf.mxu0
  %v588 = vadd.f32 0.0, %v587
  %v589 = vpop.f32.mrf.mxu0
  %v590 = vpop.f32.mrf.mxu0
  %v591 = vadd.f32 0.0, %v590
  %v592 = vpop.f32.mrf.mxu0
  %593 = vmatprep.mubr.bf16.mxu0 0
  %594 = vmatmul.mubr.bf16.gmra.mxu0 %v334
  %v595 = vpop.f32.mrf.mxu0
  %v596 = vadd.f32 0.0, %v595
  %v597 = vpop.f32.mrf.mxu0
  %v598 = vpop.f32.mrf.mxu0
  %v599 = vadd.f32 0.0, %v598
  %v600 = vpop.f32.mrf.mxu0
  %601 = vmatprep.mubr.bf16.mxu0 0
  %602 = vmatmul.mubr.bf16.gmra.mxu0 %v337
  %v603 = vpop.f32.mrf.mxu0
  %v604 = vadd.f32 0.0, %v603
  %v605 = vpop.f32.mrf.mxu0
  %v606 = vpop.f32.mrf.mxu0
  %v607 = vadd.f32 0.0, %v606
  %v608 = vpop.f32.mrf.mxu0
  %609 = vmatprep.mubr.bf16.mxu0 0
  %610 = vmatmul.mubr.bf16.gmra.mxu0 %v340
  %v611 = vpop.f32.mrf.mxu0
  %v612 = vadd.f32 0.0, %v611
  %v613 = vpop.f32.mrf.mxu0
  %v614 = vpop.f32.mrf.mxu0
  %v615 = vadd.f32 0.0, %v614
  %v616 = vpop.f32.mrf.mxu0
  %617 = vmatprep.mubr.bf16.mxu0 0
  %618 = vmatmul.mubr.bf16.gmra.mxu0 %v343
  %v619 = vpop.f32.mrf.mxu0
  %v620 = vadd.f32 0.0, %v619
  %v621 = vpop.f32.mrf.mxu0
  %v622 = vpop.f32.mrf.mxu0
  %v623 = vadd.f32 0.0, %v622
  %v624 = vpop.f32.mrf.mxu0
  %625 = vmatprep.mubr.bf16.mxu0 0
  %626 = vmatmul.mubr.bf16.gmra.mxu0 %v346
  %v627 = vpop.f32.mrf.mxu0
  %v628 = vadd.f32 0.0, %v627
  %v629 = vpop.f32.mrf.mxu0
  %v630 = vpop.f32.mrf.mxu0
  %v631 = vadd.f32 0.0, %v630
  %v632 = vpop.f32.mrf.mxu0
  %633 = vmatprep.mubr.bf16.mxu0 0
  %634 = vmatmul.mubr.bf16.gmra.mxu0 %v349
  %v635 = vpop.f32.mrf.mxu0
  %v636 = vadd.f32 0.0, %v635
  %v637 = vpop.f32.mrf.mxu0
  %v638 = vpop.f32.mrf.mxu0
  %v639 = vadd.f32 0.0, %v638
  %v640 = vpop.f32.mrf.mxu0
  %641 = vmatprep.mubr.bf16.mxu0 0
  %642 = vmatmul.mubr.bf16.gmra.mxu0 %v352
  %v643 = vpop.f32.mrf.mxu0
  %v644 = vadd.f32 0.0, %v643
  %v645 = vpop.f32.mrf.mxu0
  %v646 = vpop.f32.mrf.mxu0
  %v647 = vadd.f32 0.0, %v646
  %v648 = vpop.f32.mrf.mxu0
  %649 = vdwg.mxu0
  %v650 = vld [vmem:[%s2] sm:$0x1]
  %v652 = vlaneseq
  %v653 = vshrl.u32 %v652, 7
  %v654 = vsub.s32 0, %v653
  %v655 = vrot.slane %v650, %v654
  %v657 = vmul.f32 %v396, %v655
  %v658 = vmul.f32 %v399, %v655
  %v659 = vmul.f32 %v404, %v655
  %v660 = vmul.f32 %v407, %v655
  %v661 = vmul.f32 %v412, %v655
  %v662 = vmul.f32 %v415, %v655
  %v663 = vmul.f32 %v420, %v655
  %v664 = vmul.f32 %v423, %v655
  %v665 = vmul.f32 %v428, %v655
  %v666 = vmul.f32 %v431, %v655
  %v667 = vmul.f32 %v436, %v655
  %v668 = vmul.f32 %v439, %v655
  %v669 = vmul.f32 %v444, %v655
  %v670 = vmul.f32 %v447, %v655
  %v671 = vmul.f32 %v452, %v655
  %v672 = vmul.f32 %v455, %v655
  %v673 = vmul.f32 %v460, %v655
  %v674 = vmul.f32 %v463, %v655
  %v675 = vmul.f32 %v468, %v655
  %v676 = vmul.f32 %v471, %v655
  %v677 = vmul.f32 %v476, %v655
  %v678 = vmul.f32 %v479, %v655
  %v679 = vmul.f32 %v484, %v655
  %v680 = vmul.f32 %v487, %v655
  %v681 = vmul.f32 %v492, %v655
  %v682 = vmul.f32 %v495, %v655
  %v683 = vmul.f32 %v500, %v655
  %v684 = vmul.f32 %v503, %v655
  %v685 = vmul.f32 %v508, %v655
  %v686 = vmul.f32 %v511, %v655
  %v687 = vmul.f32 %v516, %v655
  %v688 = vmul.f32 %v519, %v655
  %v689 = vmul.f32 %v524, %v655
  %v690 = vmul.f32 %v527, %v655
  %v691 = vmul.f32 %v532, %v655
  %v692 = vmul.f32 %v535, %v655
  %v693 = vmul.f32 %v540, %v655
  %v694 = vmul.f32 %v543, %v655
  %v695 = vmul.f32 %v548, %v655
  %v696 = vmul.f32 %v551, %v655
  %v697 = vmul.f32 %v556, %v655
  %v698 = vmul.f32 %v559, %v655
  %v699 = vmul.f32 %v564, %v655
  %v700 = vmul.f32 %v567, %v655
  %v701 = vmul.f32 %v572, %v655
  %v702 = vmul.f32 %v575, %v655
  %v703 = vmul.f32 %v580, %v655
  %v704 = vmul.f32 %v583, %v655
  %v705 = vmul.f32 %v588, %v655
  %v706 = vmul.f32 %v591, %v655
  %v707 = vmul.f32 %v596, %v655
  %v708 = vmul.f32 %v599, %v655
  %v709 = vmul.f32 %v604, %v655
  %v710 = vmul.f32 %v607, %v655
  %v711 = vmul.f32 %v612, %v655
  %v712 = vmul.f32 %v615, %v655
  %v713 = vmul.f32 %v620, %v655
  %v714 = vmul.f32 %v623, %v655
  %v715 = vmul.f32 %v628, %v655
  %v716 = vmul.f32 %v631, %v655
  %v717 = vmul.f32 %v636, %v655
  %v718 = vmul.f32 %v639, %v655
  %v719 = vmul.f32 %v644, %v655
  %v720 = vmul.f32 %v647, %v655
  %v721 = vld [vmem:[%s3] sm:$0x1]
  %v723 = vlaneseq
  %v724 = vshrl.u32 %v723, 7
  %v725 = vsub.s32 0, %v724
  %v726 = vrot.slane %v721, %v725
  %v728 = vadd.f32 %v657, %v726
  %v729 = vadd.f32 %v658, %v726
  %v730 = vadd.f32 %v659, %v726
  %v731 = vadd.f32 %v660, %v726
  %v732 = vadd.f32 %v661, %v726
  %v733 = vadd.f32 %v662, %v726
  %v734 = vadd.f32 %v663, %v726
  %v735 = vadd.f32 %v664, %v726
  %v736 = vadd.f32 %v665, %v726
  %v737 = vadd.f32 %v666, %v726
  %v738 = vadd.f32 %v667, %v726
  %v739 = vadd.f32 %v668, %v726
  %v740 = vadd.f32 %v669, %v726
  %v741 = vadd.f32 %v670, %v726
  %v742 = vadd.f32 %v671, %v726
  %v743 = vadd.f32 %v672, %v726
  %v744 = vadd.f32 %v673, %v726
  %v745 = vadd.f32 %v674, %v726
  %v746 = vadd.f32 %v675, %v726
  %v747 = vadd.f32 %v676, %v726
  %v748 = vadd.f32 %v677, %v726
  %v749 = vadd.f32 %v678, %v726
  %v750 = vadd.f32 %v679, %v726
  %v751 = vadd.f32 %v680, %v726
  %v752 = vadd.f32 %v681, %v726
  %v753 = vadd.f32 %v682, %v726
  %v754 = vadd.f32 %v683, %v726
  %v755 = vadd.f32 %v684, %v726
  %v756 = vadd.f32 %v685, %v726
  %v757 = vadd.f32 %v686, %v726
  %v758 = vadd.f32 %v687, %v726
  %v759 = vadd.f32 %v688, %v726
  %v760 = vadd.f32 %v689, %v726
  %v761 = vadd.f32 %v690, %v726
  %v762 = vadd.f32 %v691, %v726
  %v763 = vadd.f32 %v692, %v726
  %v764 = vadd.f32 %v693, %v726
  %v765 = vadd.f32 %v694, %v726
  %v766 = vadd.f32 %v695, %v726
  %v767 = vadd.f32 %v696, %v726
  %v768 = vadd.f32 %v697, %v726
  %v769 = vadd.f32 %v698, %v726
  %v770 = vadd.f32 %v699, %v726
  %v771 = vadd.f32 %v700, %v726
  %v772 = vadd.f32 %v701, %v726
  %v773 = vadd.f32 %v702, %v726
  %v774 = vadd.f32 %v703, %v726
  %v775 = vadd.f32 %v704, %v726
  %v776 = vadd.f32 %v705, %v726
  %v777 = vadd.f32 %v706, %v726
  %v778 = vadd.f32 %v707, %v726
  %v779 = vadd.f32 %v708, %v726
  %v780 = vadd.f32 %v709, %v726
  %v781 = vadd.f32 %v710, %v726
  %v782 = vadd.f32 %v711, %v726
  %v783 = vadd.f32 %v712, %v726
  %v784 = vadd.f32 %v713, %v726
  %v785 = vadd.f32 %v714, %v726
  %v786 = vadd.f32 %v715, %v726
  %v787 = vadd.f32 %v716, %v726
  %v788 = vadd.f32 %v717, %v726
  %v789 = vadd.f32 %v718, %v726
  %v790 = vadd.f32 %v719, %v726
  %v791 = vadd.f32 %v720, %v726
  %v792 = vmax.f32 %v728, 0.0
  %v793 = vmax.f32 %v729, 0.0
  %v794 = vmax.f32 %v730, 0.0
  %v795 = vmax.f32 %v731, 0.0
  %v796 = vmax.f32 %v732, 0.0
  %v797 = vmax.f32 %v733, 0.0
  %v798 = vmax.f32 %v734, 0.0
  %v799 = vmax.f32 %v735, 0.0
  %v800 = vmax.f32 %v736, 0.0
  %v801 = vmax.f32 %v737, 0.0
  %v802 = vmax.f32 %v738, 0.0
  %v803 = vmax.f32 %v739, 0.0
  %v804 = vmax.f32 %v740, 0.0
  %v805 = vmax.f32 %v741, 0.0
  %v806 = vmax.f32 %v742, 0.0
  %v807 = vmax.f32 %v743, 0.0
  %v808 = vmax.f32 %v744, 0.0
  %v809 = vmax.f32 %v745, 0.0
  %v810 = vmax.f32 %v746, 0.0
  %v811 = vmax.f32 %v747, 0.0
  %v812 = vmax.f32 %v748, 0.0
  %v813 = vmax.f32 %v749, 0.0
  %v814 = vmax.f32 %v750, 0.0
  %v815 = vmax.f32 %v751, 0.0
  %v816 = vmax.f32 %v752, 0.0
  %v817 = vmax.f32 %v753, 0.0
  %v818 = vmax.f32 %v754, 0.0
  %v819 = vmax.f32 %v755, 0.0
  %v820 = vmax.f32 %v756, 0.0
  %v821 = vmax.f32 %v757, 0.0
  %v822 = vmax.f32 %v758, 0.0
  %v823 = vmax.f32 %v759, 0.0
  %v824 = vmax.f32 %v760, 0.0
  %v825 = vmax.f32 %v761, 0.0
  %v826 = vmax.f32 %v762, 0.0
  %v827 = vmax.f32 %v763, 0.0
  %v828 = vmax.f32 %v764, 0.0
  %v829 = vmax.f32 %v765, 0.0
  %v830 = vmax.f32 %v766, 0.0
  %v831 = vmax.f32 %v767, 0.0
  %v832 = vmax.f32 %v768, 0.0
  %v833 = vmax.f32 %v769, 0.0
  %v834 = vmax.f32 %v770, 0.0
  %v835 = vmax.f32 %v771, 0.0
  %v836 = vmax.f32 %v772, 0.0
  %v837 = vmax.f32 %v773, 0.0
  %v838 = vmax.f32 %v774, 0.0
  %v839 = vmax.f32 %v775, 0.0
  %v840 = vmax.f32 %v776, 0.0
  %v841 = vmax.f32 %v777, 0.0
  %v842 = vmax.f32 %v778, 0.0
  %v843 = vmax.f32 %v779, 0.0
  %v844 = vmax.f32 %v780, 0.0
  %v845 = vmax.f32 %v781, 0.0
  %v846 = vmax.f32 %v782, 0.0
  %v847 = vmax.f32 %v783, 0.0
  %v848 = vmax.f32 %v784, 0.0
  %v849 = vmax.f32 %v785, 0.0
  %v850 = vmax.f32 %v786, 0.0
  %v851 = vmax.f32 %v787, 0.0
  %v852 = vmax.f32 %v788, 0.0
  %v853 = vmax.f32 %v789, 0.0
  %v854 = vmax.f32 %v790, 0.0
  %v855 = vmax.f32 %v791, 0.0
  %v856 = vpack.c.bf16 %v793, %v792
  %v857 = vpack.c.bf16 %v795, %v794
  %v858 = vpack.c.bf16 %v797, %v796
  %v859 = vpack.c.bf16 %v799, %v798
  %v860 = vpack.c.bf16 %v801, %v800
  %v861 = vpack.c.bf16 %v803, %v802
  %v862 = vpack.c.bf16 %v805, %v804
  %v863 = vpack.c.bf16 %v807, %v806
  %v864 = vpack.c.bf16 %v809, %v808
  %v865 = vpack.c.bf16 %v811, %v810
  %v866 = vpack.c.bf16 %v813, %v812
  %v867 = vpack.c.bf16 %v815, %v814
  %v868 = vpack.c.bf16 %v817, %v816
  %v869 = vpack.c.bf16 %v819, %v818
  %v870 = vpack.c.bf16 %v821, %v820
  %v871 = vpack.c.bf16 %v823, %v822
  %v872 = vpack.c.bf16 %v825, %v824
  %v873 = vpack.c.bf16 %v827, %v826
  %v874 = vpack.c.bf16 %v829, %v828
  %v875 = vpack.c.bf16 %v831, %v830
  %v876 = vpack.c.bf16 %v833, %v832
  %v877 = vpack.c.bf16 %v835, %v834
  %v878 = vpack.c.bf16 %v837, %v836
  %v879 = vpack.c.bf16 %v839, %v838
  %v880 = vpack.c.bf16 %v841, %v840
  %v881 = vpack.c.bf16 %v843, %v842
  %v882 = vpack.c.bf16 %v845, %v844
  %v883 = vpack.c.bf16 %v847, %v846
  %v884 = vpack.c.bf16 %v849, %v848
  %v885 = vpack.c.bf16 %v851, %v850
  %v886 = vpack.c.bf16 %v853, %v852
  %v887 = vpack.c.bf16 %v855, %v854
  %v920 = vunpack.c.l.b16 %v856
  %v921 = vunpack.c.h.b16 %v856
  %v922 = vunpack.c.l.b16 %v857
  %v923 = vunpack.c.h.b16 %v857
  %v924 = vunpack.c.l.b16 %v858
  %v925 = vunpack.c.h.b16 %v858
  %v926 = vunpack.c.l.b16 %v859
  %v927 = vunpack.c.h.b16 %v859
  %v928 = vunpack.c.l.b16 %v860
  %v929 = vunpack.c.h.b16 %v860
  %v930 = vunpack.c.l.b16 %v861
  %v931 = vunpack.c.h.b16 %v861
  %v932 = vunpack.c.l.b16 %v862
  %v933 = vunpack.c.h.b16 %v862
  %v934 = vunpack.c.l.b16 %v863
  %v935 = vunpack.c.h.b16 %v863
  %v936 = vunpack.c.l.b16 %v864
  %v937 = vunpack.c.h.b16 %v864
  %v938 = vunpack.c.l.b16 %v865
  %v939 = vunpack.c.h.b16 %v865
  %v940 = vunpack.c.l.b16 %v866
  %v941 = vunpack.c.h.b16 %v866
  %v942 = vunpack.c.l.b16 %v867
  %v943 = vunpack.c.h.b16 %v867
  %v944 = vunpack.c.l.b16 %v868
  %v945 = vunpack.c.h.b16 %v868
  %v946 = vunpack.c.l.b16 %v869
  %v947 = vunpack.c.h.b16 %v869
  %v948 = vunpack.c.l.b16 %v870
  %v949 = vunpack.c.h.b16 %v870
  %v950 = vunpack.c.l.b16 %v871
  %v951 = vunpack.c.h.b16 %v871
  %v952 = vunpack.c.l.b16 %v872
  %v953 = vunpack.c.h.b16 %v872
  %v954 = vunpack.c.l.b16 %v873
  %v955 = vunpack.c.h.b16 %v873
  %v956 = vunpack.c.l.b16 %v874
  %v957 = vunpack.c.h.b16 %v874
  %v958 = vunpack.c.l.b16 %v875
  %v959 = vunpack.c.h.b16 %v875
  %v960 = vunpack.c.l.b16 %v876
  %v961 = vunpack.c.h.b16 %v876
  %v962 = vunpack.c.l.b16 %v877
  %v963 = vunpack.c.h.b16 %v877
  %v964 = vunpack.c.l.b16 %v878
  %v965 = vunpack.c.h.b16 %v878
  %v966 = vunpack.c.l.b16 %v879
  %v967 = vunpack.c.h.b16 %v879
  %v968 = vunpack.c.l.b16 %v880
  %v969 = vunpack.c.h.b16 %v880
  %v970 = vunpack.c.l.b16 %v881
  %v971 = vunpack.c.h.b16 %v881
  %v972 = vunpack.c.l.b16 %v882
  %v973 = vunpack.c.h.b16 %v882
  %v974 = vunpack.c.l.b16 %v883
  %v975 = vunpack.c.h.b16 %v883
  %v976 = vunpack.c.l.b16 %v884
  %v977 = vunpack.c.h.b16 %v884
  %v978 = vunpack.c.l.b16 %v885
  %v979 = vunpack.c.h.b16 %v885
  %v980 = vunpack.c.l.b16 %v886
  %v981 = vunpack.c.h.b16 %v886
  %v982 = vunpack.c.l.b16 %v887
  %v983 = vunpack.c.h.b16 %v887
  %v984 = vpack.c.b16 %v920, %v920
  %v985 = vpack.c.b16 %v921, %v921
  %v986 = vpack.c.b16 %v922, %v922
  %v987 = vpack.c.b16 %v923, %v923
  %v988 = vpack.c.b16 %v924, %v924
  %v989 = vpack.c.b16 %v925, %v925
  %v990 = vpack.c.b16 %v926, %v926
  %v991 = vpack.c.b16 %v927, %v927
  %v992 = vpack.c.b16 %v928, %v928
  %v993 = vpack.c.b16 %v929, %v929
  %v994 = vpack.c.b16 %v930, %v930
  %v995 = vpack.c.b16 %v931, %v931
  %v996 = vpack.c.b16 %v932, %v932
  %v997 = vpack.c.b16 %v933, %v933
  %v998 = vpack.c.b16 %v934, %v934
  %v999 = vpack.c.b16 %v935, %v935
  %v1000 = vpack.c.b16 %v936, %v936
  %v1001 = vpack.c.b16 %v937, %v937
  %v1002 = vpack.c.b16 %v938, %v938
  %v1003 = vpack.c.b16 %v939, %v939
  %v1004 = vpack.c.b16 %v940, %v940
  %v1005 = vpack.c.b16 %v941, %v941
  %v1006 = vpack.c.b16 %v942, %v942
  %v1007 = vpack.c.b16 %v943, %v943
  %v1008 = vpack.c.b16 %v944, %v944
  %v1009 = vpack.c.b16 %v945, %v945
  %v1010 = vpack.c.b16 %v946, %v946
  %v1011 = vpack.c.b16 %v947, %v947
  %v1012 = vpack.c.b16 %v948, %v948
  %v1013 = vpack.c.b16 %v949, %v949
  %v1014 = vpack.c.b16 %v950, %v950
  %v1015 = vpack.c.b16 %v951, %v951
  %v1016 = vpack.c.b16 %v952, %v952
  %v1017 = vpack.c.b16 %v953, %v953
  %v1018 = vpack.c.b16 %v954, %v954
  %v1019 = vpack.c.b16 %v955, %v955
  %v1020 = vpack.c.b16 %v956, %v956
  %v1021 = vpack.c.b16 %v957, %v957
  %v1022 = vpack.c.b16 %v958, %v958
  %v1023 = vpack.c.b16 %v959, %v959
  %v1024 = vpack.c.b16 %v960, %v960
  %v1025 = vpack.c.b16 %v961, %v961
  %v1026 = vpack.c.b16 %v962, %v962
  %v1027 = vpack.c.b16 %v963, %v963
  %v1028 = vpack.c.b16 %v964, %v964
  %v1029 = vpack.c.b16 %v965, %v965
  %v1030 = vpack.c.b16 %v966, %v966
  %v1031 = vpack.c.b16 %v967, %v967
  %v1032 = vpack.c.b16 %v968, %v968
  %v1033 = vpack.c.b16 %v969, %v969
  %v1034 = vpack.c.b16 %v970, %v970
  %v1035 = vpack.c.b16 %v971, %v971
  %v1036 = vpack.c.b16 %v972, %v972
  %v1037 = vpack.c.b16 %v973, %v973
  %v1038 = vpack.c.b16 %v974, %v974
  %v1039 = vpack.c.b16 %v975, %v975
  %v1040 = vpack.c.b16 %v976, %v976
  %v1041 = vpack.c.b16 %v977, %v977
  %v1042 = vpack.c.b16 %v978, %v978
  %v1043 = vpack.c.b16 %v979, %v979
  %v1044 = vpack.c.b16 %v980, %v980
  %v1045 = vpack.c.b16 %v981, %v981
  %v1046 = vpack.c.b16 %v982, %v982
  %v1047 = vpack.c.b16 %v983, %v983
  %vm1112 = vcmask 60416
  %1113 = vst.msk [vmem:[%s4] sm:$0xf] %vm1112, %v984
  %1114 = vst.msk [vmem:[%s4 + $0x4] sm:$0xf] %vm1112, %v985
  %1115 = vst.msk [vmem:[%s4 + $0x8] sm:$0xf] %vm1112, %v986
  %1116 = vst.msk [vmem:[%s4 + $0xc] sm:$0xf] %vm1112, %v987
  %1117 = vst.msk [vmem:[%s4 + $0x10] sm:$0xf] %vm1112, %v988
  %1118 = vst.msk [vmem:[%s4 + $0x14] sm:$0xf] %vm1112, %v989
  %1119 = vst.msk [vmem:[%s4 + $0x18] sm:$0xf] %vm1112, %v990
  %1120 = vst.msk [vmem:[%s4 + $0x1c] sm:$0xf] %vm1112, %v991
  %1121 = vst.msk [vmem:[%s4 + $0x20] sm:$0xf] %vm1112, %v992
  %1122 = vst.msk [vmem:[%s4 + $0x24] sm:$0xf] %vm1112, %v993
  %1123 = vst.msk [vmem:[%s4 + $0x28] sm:$0xf] %vm1112, %v994
  %1124 = vst.msk [vmem:[%s4 + $0x2c] sm:$0xf] %vm1112, %v995
  %1125 = vst.msk [vmem:[%s4 + $0x30] sm:$0xf] %vm1112, %v996
  %1126 = vst.msk [vmem:[%s4 + $0x34] sm:$0xf] %vm1112, %v997
  %1127 = vst.msk [vmem:[%s4 + $0x38] sm:$0xf] %vm1112, %v998
  %1128 = vst.msk [vmem:[%s4 + $0x3c] sm:$0xf] %vm1112, %v999
  %1129 = vst.msk [vmem:[%s4 + $0x40] sm:$0xf] %vm1112, %v1000
  %1130 = vst.msk [vmem:[%s4 + $0x44] sm:$0xf] %vm1112, %v1001
  %1131 = vst.msk [vmem:[%s4 + $0x48] sm:$0xf] %vm1112, %v1002
  %1132 = vst.msk [vmem:[%s4 + $0x4c] sm:$0xf] %vm1112, %v1003
  %1133 = vst.msk [vmem:[%s4 + $0x50] sm:$0xf] %vm1112, %v1004
  %1134 = vst.msk [vmem:[%s4 + $0x54] sm:$0xf] %vm1112, %v1005
  %1135 = vst.msk [vmem:[%s4 + $0x58] sm:$0xf] %vm1112, %v1006
  %1136 = vst.msk [vmem:[%s4 + $0x5c] sm:$0xf] %vm1112, %v1007
  %1137 = vst.msk [vmem:[%s4 + $0x60] sm:$0xf] %vm1112, %v1008
  %1138 = vst.msk [vmem:[%s4 + $0x64] sm:$0xf] %vm1112, %v1009
  %1139 = vst.msk [vmem:[%s4 + $0x68] sm:$0xf] %vm1112, %v1010
  %1140 = vst.msk [vmem:[%s4 + $0x6c] sm:$0xf] %vm1112, %v1011
  %1141 = vst.msk [vmem:[%s4 + $0x70] sm:$0xf] %vm1112, %v1012
  %1142 = vst.msk [vmem:[%s4 + $0x74] sm:$0xf] %vm1112, %v1013
  %1143 = vst.msk [vmem:[%s4 + $0x78] sm:$0xf] %vm1112, %v1014
  %1144 = vst.msk [vmem:[%s4 + $0x7c] sm:$0xf] %vm1112, %v1015
  %1145 = vst.msk [vmem:[%s4 + $0x80] sm:$0xf] %vm1112, %v1016
  %1146 = vst.msk [vmem:[%s4 + $0x84] sm:$0xf] %vm1112, %v1017
  %1147 = vst.msk [vmem:[%s4 + $0x88] sm:$0xf] %vm1112, %v1018
  %1148 = vst.msk [vmem:[%s4 + $0x8c] sm:$0xf] %vm1112, %v1019
  %1149 = vst.msk [vmem:[%s4 + $0x90] sm:$0xf] %vm1112, %v1020
  %1150 = vst.msk [vmem:[%s4 + $0x94] sm:$0xf] %vm1112, %v1021
  %1151 = vst.msk [vmem:[%s4 + $0x98] sm:$0xf] %vm1112, %v1022
  %1152 = vst.msk [vmem:[%s4 + $0x9c] sm:$0xf] %vm1112, %v1023
  %1153 = vst.msk [vmem:[%s4 + $0xa0] sm:$0xf] %vm1112, %v1024
  %1154 = vst.msk [vmem:[%s4 + $0xa4] sm:$0xf] %vm1112, %v1025
  %1155 = vst.msk [vmem:[%s4 + $0xa8] sm:$0xf] %vm1112, %v1026
  %1156 = vst.msk [vmem:[%s4 + $0xac] sm:$0xf] %vm1112, %v1027
  %1157 = vst.msk [vmem:[%s4 + $0xb0] sm:$0xf] %vm1112, %v1028
  %1158 = vst.msk [vmem:[%s4 + $0xb4] sm:$0xf] %vm1112, %v1029
  %1159 = vst.msk [vmem:[%s4 + $0xb8] sm:$0xf] %vm1112, %v1030
  %1160 = vst.msk [vmem:[%s4 + $0xbc] sm:$0xf] %vm1112, %v1031
  %1161 = vst.msk [vmem:[%s4 + $0xc0] sm:$0xf] %vm1112, %v1032
  %1162 = vst.msk [vmem:[%s4 + $0xc4] sm:$0xf] %vm1112, %v1033
  %1163 = vst.msk [vmem:[%s4 + $0xc8] sm:$0xf] %vm1112, %v1034
  %1164 = vst.msk [vmem:[%s4 + $0xcc] sm:$0xf] %vm1112, %v1035
  %1165 = vst.msk [vmem:[%s4 + $0xd0] sm:$0xf] %vm1112, %v1036
  %1166 = vst.msk [vmem:[%s4 + $0xd4] sm:$0xf] %vm1112, %v1037
  %1167 = vst.msk [vmem:[%s4 + $0xd8] sm:$0xf] %vm1112, %v1038
  %1168 = vst.msk [vmem:[%s4 + $0xdc] sm:$0xf] %vm1112, %v1039
  %1169 = vst.msk [vmem:[%s4 + $0xe0] sm:$0xf] %vm1112, %v1040
  %1170 = vst.msk [vmem:[%s4 + $0xe4] sm:$0xf] %vm1112, %v1041
  %1171 = vst.msk [vmem:[%s4 + $0xe8] sm:$0xf] %vm1112, %v1042
  %1172 = vst.msk [vmem:[%s4 + $0xec] sm:$0xf] %vm1112, %v1043
  %1173 = vst.msk [vmem:[%s4 + $0xf0] sm:$0xf] %vm1112, %v1044
  %1174 = vst.msk [vmem:[%s4 + $0xf4] sm:$0xf] %vm1112, %v1045
  %1175 = vst.msk [vmem:[%s4 + $0xf8] sm:$0xf] %vm1112, %v1046
  %1176 = vst.msk [vmem:[%s4 + $0xfc] sm:$0xf] %vm1112, %v1047
  // Predicated region
  $region18: #{tpu_custom_call.1} parent=0 // pred_check
    _
  $region19: #{tpu_custom_call.1} parent=0 // pred_check_branch
    %1178 = sbr.rel (0) target = $region21
  $region20: #{tpu_custom_call.1} parent=0 // pred_region
    _
  $region21: #{tpu_custom_call.1} parent=0 // pred_fallthru
    _
  // Predicated region
  $region22: #{tpu_custom_call.1} parent=0 // pred_check
    _
  $region23: #{tpu_custom_call.1} parent=0 // pred_check_branch
    %1180 = sbr.rel (0) target = $region25
  $region24: #{tpu_custom_call.1} parent=0 // pred_region
    _
  $region25: #{tpu_custom_call.1} parent=0 // pred_fallthru
    _

</llo_original>
